<compile_context>
chip_gen: v5e
topology: v5e:2x2
jax: 0.10.0
libtpu: 0.0.40
codegen_flags: <defaults>
</compile_context>

<pallas_src>
import functools

import jax
import jax.numpy as jnp
from jax.experimental import pallas as pl
from jax.experimental.pallas import tpu as pltpu


def _wavenet_kernel(x_ref, wdil_ref, bdil_ref, wout_ref, bout_ref,
                    skip_ref, res_ref, *, c_gate, c_res, mxu_dtype):
    """One (batch, time-tile) grid step.  Time sits in the lane dimension.

    x_ref    : (1, K*C_res, TILE_T)  pre-stacked dilated taps (row block k = tap k)
    wdil_ref : (2*C_gate, K*C_res)   fused filter+gate conv weights
    bdil_ref : (2*C_gate, 1)
    wout_ref : (C_res+C_skip, C_gate) fused residual+skip 1x1 conv weights
    bout_ref : (C_res+C_skip, 1)
    skip_ref : (1, C_skip, TILE_T)   res_ref : (1, C_res, TILE_T)
    """
    x = x_ref[0]                                        # (K*C_res, TILE_T)
    wdil = wdil_ref[...]
    wout = wout_ref[...]
    if mxu_dtype is not None:                           # optional bf16 MXU inputs (v6e/v7x)
        x_mm = x.astype(mxu_dtype)
        wdil = wdil.astype(mxu_dtype)
        wout = wout.astype(mxu_dtype)
    else:
        x_mm = x

    # Dilated causal conv, gate + filter halves in ONE MXU push (contraction = K*C_res).
    y = jnp.dot(wdil, x_mm, preferred_element_type=jnp.float32) + bdil_ref[...]

    # Gated activation in f32 (VPU/EUP, lane-dense along time).
    gated = y[:c_gate] * jax.nn.sigmoid(y[c_gate:])
    gated_mm = gated.astype(mxu_dtype) if mxu_dtype is not None else gated

    # Residual + skip 1x1 convs fused into one MXU push.
    out = jnp.dot(wout, gated_mm, preferred_element_type=jnp.float32) + bout_ref[...]

    x_orig = x[-c_res:].astype(jnp.float32)             # unshifted tap (k = K-1)
    skip_ref[0] = out[c_res:].astype(skip_ref.dtype)
    res_ref[0] = (out[:c_res] + x_orig).astype(res_ref.dtype)


def wavenet_block(x_ncl, params, *, channels_gate, dilation, kernel_size=2,
                  tile_t=512, mxu_dtype=None):
    """Pallas implementation of WavenetBlock.forward.  x_ncl: (B, C_res, T) -> (skip, residuals)."""
    # Reproduce the swapped positional args of the PyTorch module:
    # effective conv kernel size = `dilation` arg, effective dilation = `kernel_size` arg.
    k_size = dilation
    dil = kernel_size
    pad = (k_size - 1) * dil

    w_dil, b_dil, w_res, b_res, w_skip, b_skip = params
    B, C_res, T = x_ncl.shape
    C_gate = channels_gate
    C_skip = w_skip.shape[0]
    dt = x_ncl.dtype
    itemsize = jnp.dtype(dt).itemsize

    # --- stack the K dilated taps along the channel (contraction) axis -------------
    # x_stack[:, k*C_res:(k+1)*C_res, t] = x_pad[:, :, t + k*dil]  (left-zero-padded)
    x_pad = jnp.pad(x_ncl, ((0, 0), (0, 0), (pad, 0)))
    x_stack = jnp.concatenate(
        [x_pad[:, :, k * dil: k * dil + T] for k in range(k_size)], axis=1)   # (B, K*C_res, T)

    # --- fuse weights ----------------------------------------------------------------
    # w_dil: (2*C_gate, C_res, K)  ->  (2*C_gate, K*C_res), column block k == tap k.
    w_dil_f = jnp.transpose(w_dil, (0, 2, 1)).reshape(2 * C_gate, k_size * C_res)
    b_dil_f = b_dil.reshape(2 * C_gate, 1)
    w_out_f = jnp.concatenate([w_res[:, :, 0], w_skip[:, :, 0]], axis=0)      # (C_res+C_skip, C_gate)
    b_out_f = jnp.concatenate([b_res, b_skip]).reshape(C_res + C_skip, 1)

    # --- time tiling (lane-dense; (8,128) rule: tile == T or a multiple of 128) ------
    tile = T if T <= tile_t else tile_t
    nt = pl.cdiv(T, tile)

    kernel = functools.partial(_wavenet_kernel, c_gate=C_gate, c_res=C_res,
                               mxu_dtype=mxu_dtype)

    def full(shape):
        return pl.BlockSpec(shape, lambda b, t: (0,) * len(shape))

    cost = pl.CostEstimate(
        flops=int(2 * B * T * (2 * C_gate) * (k_size * C_res)
                  + 2 * B * T * (C_res + C_skip) * C_gate),
        transcendentals=int(B * T * C_gate),
        bytes_accessed=int(x_stack.size * itemsize
                           + (w_dil_f.size + w_out_f.size + b_dil_f.size + b_out_f.size) * itemsize
                           + B * T * (C_res + C_skip) * itemsize),
    )

    skip, residuals = pl.pallas_call(
        kernel,
        out_shape=(jax.ShapeDtypeStruct((B, C_skip, T), dt),
                   jax.ShapeDtypeStruct((B, C_res, T), dt)),
        grid=(B, nt),
        in_specs=[
            pl.BlockSpec((1, k_size * C_res, tile), lambda b, t: (b, 0, t)),
            full(w_dil_f.shape), full(b_dil_f.shape),
            full(w_out_f.shape), full(b_out_f.shape),
        ],
        out_specs=(pl.BlockSpec((1, C_skip, tile), lambda b, t: (b, 0, t)),
                   pl.BlockSpec((1, C_res, tile), lambda b, t: (b, 0, t))),
        compiler_params=pltpu.CompilerParams(
            dimension_semantics=("parallel", "parallel"),
            vmem_limit_bytes=32 * 1024 * 1024,   # explicit budget (fits v7x's 64 MiB physical)
        ),
        cost_estimate=cost,
    )(x_stack, w_dil_f, b_dil_f, w_out_f, b_out_f)

    return skip, residuals


def wavenet_block_ref(x, params, *, channels_gate, dilation, kernel_size=2):
    """Pure-JAX reference (NCL, matches PyTorch semantics incl. the positional-arg swap)."""
    k_size = dilation
    dil = kernel_size
    pad = (k_size - 1) * dil
    w_dil, b_dil, w_res, b_res, w_skip, b_skip = params
    B, C_res, T = x.shape
    x_pad = jnp.pad(x, ((0, 0), (0, 0), (pad, 0)))
    y = jnp.zeros((B, w_dil.shape[0], T), jnp.float32)
    for k in range(k_size):
        xs = x_pad[:, :, k * dil: k * dil + T]
        y = y + jnp.einsum('bct,oc->bot', xs, w_dil[:, :, k])
    y = y + b_dil[None, :, None]
    gated = y[:, :channels_gate, :] * jax.nn.sigmoid(y[:, channels_gate:, :])
    residuals = jnp.einsum('bgt,og->bot', gated, w_res[:, :, 0]) + b_res[None, :, None] + x
    skip = jnp.einsum('bgt,og->bot', gated, w_skip[:, :, 0]) + b_skip[None, :, None]
    return skip.astype(x.dtype), residuals.astype(x.dtype)


if __name__ == "__main__":
    B, T = 2, 128
    channels_gate, channels_residual, channels_skip = 8, 8, 16
    dilation, kernel_size = 2, 2
    # Effective conv hyper-params after the module's positional-arg swap:
    k_size_eff = dilation

    key = jax.random.PRNGKey(0)
    keys = jax.random.split(key, 7)
    w_dil = 0.1 * jax.random.normal(keys[0], (2 * channels_gate, channels_residual, k_size_eff), jnp.float32)
    b_dil = 0.1 * jax.random.normal(keys[1], (2 * channels_gate,), jnp.float32)
    w_res = 0.1 * jax.random.normal(keys[2], (channels_residual, channels_gate, 1), jnp.float32)
    b_res = 0.1 * jax.random.normal(keys[3], (channels_residual,), jnp.float32)
    w_skip = 0.1 * jax.random.normal(keys[4], (channels_skip, channels_gate, 1), jnp.float32)
    b_skip = 0.1 * jax.random.normal(keys[5], (channels_skip,), jnp.float32)
    x = jax.random.normal(keys[6], (B, channels_residual, T), jnp.float32)
    params = (w_dil, b_dil, w_res, b_res, w_skip, b_skip)

    skip, residuals = wavenet_block(
        x, params, channels_gate=channels_gate, dilation=dilation, kernel_size=kernel_size)
    jax.block_until_ready((skip, residuals))

    skip_r, residuals_r = wavenet_block_ref(
        x, params, channels_gate=channels_gate, dilation=dilation, kernel_size=kernel_size)
    assert skip.shape == (B, channels_skip, T) and residuals.shape == (B, channels_residual, T)
    assert jnp.allclose(skip, skip_r, atol=1e-4), "skip output mismatch"
    assert jnp.allclose(residuals, residuals_r, atol=1e-4), "residual output mismatch"
    print("KERNEL_OK")
</pallas_src>

<mosaic_0001>
module attributes {stable_mosaic.version = 11 : i64} {
  func.func @_wavenet_kernel(%arg0: i32, %arg1: i32, %arg2: memref<1x16x128xf32, #tpu.memory_space<vmem>>, %arg3: memref<16x16xf32, #tpu.memory_space<vmem>>, %arg4: memref<16x1xf32, #tpu.memory_space<vmem>>, %arg5: memref<24x8xf32, #tpu.memory_space<vmem>>, %arg6: memref<24x1xf32, #tpu.memory_space<vmem>>, %arg7: memref<1x16x128xf32, #tpu.memory_space<vmem>>, %arg8: memref<1x8x128xf32, #tpu.memory_space<vmem>>) attributes {dimension_semantics = [#tpu.dimension_semantics<parallel>, #tpu.dimension_semantics<parallel>], iteration_bounds = array<i64: 2, 1>, scalar_prefetch = 0 : i64, scratch_operands = 0 : i64, tpu.core_type = #tpu.core_type<tc>, window_params = [{transform_indices = @transform_0, window_bounds = array<i64: 1, 16, 128>}, {pipeline_mode = #tpu.pipeline_mode<synchronous>, transform_indices = @transform_1, window_bounds = array<i64: 16, 16>}, {pipeline_mode = #tpu.pipeline_mode<synchronous>, transform_indices = @transform_2, window_bounds = array<i64: 16, 1>}, {pipeline_mode = #tpu.pipeline_mode<synchronous>, transform_indices = @transform_3, window_bounds = array<i64: 24, 8>}, {pipeline_mode = #tpu.pipeline_mode<synchronous>, transform_indices = @transform_4, window_bounds = array<i64: 24, 1>}, {transform_indices = @transform_5, window_bounds = array<i64: 1, 16, 128>}, {transform_indices = @transform_6, window_bounds = array<i64: 1, 8, 128>}]} {
    %c0 = arith.constant 0 : index
    %c0_0 = arith.constant 0 : index
    %c0_1 = arith.constant 0 : index
    %0 = vector.load %arg2[%c0, %c0_0, %c0_1] : memref<1x16x128xf32, #tpu.memory_space<vmem>>, vector<1x16x128xf32>
    %1 = vector.shape_cast %0 : vector<1x16x128xf32> to vector<16x128xf32>
    %c0_2 = arith.constant 0 : index
    %c0_3 = arith.constant 0 : index
    %2 = vector.load %arg3[%c0_2, %c0_3] : memref<16x16xf32, #tpu.memory_space<vmem>>, vector<16x16xf32>
    %c0_4 = arith.constant 0 : index
    %c0_5 = arith.constant 0 : index
    %3 = vector.load %arg5[%c0_4, %c0_5] : memref<24x8xf32, #tpu.memory_space<vmem>>, vector<24x8xf32>
    %cst = arith.constant dense<0.000000e+00> : vector<16x128xf32>
    %4 = tpu.matmul %2, %1, %cst {dimension_numbers = #tpu.dot_dimension_numbers<[1], [0], [0], [1], [0, 0, 1, 1], [], []>} : vector<16x16xf32>, vector<16x128xf32>, vector<16x128xf32> -> vector<16x128xf32>
    %c0_6 = arith.constant 0 : index
    %c0_7 = arith.constant 0 : index
    %5 = vector.load %arg4[%c0_6, %c0_7] : memref<16x1xf32, #tpu.memory_space<vmem>>, vector<16x1xf32>
    %6 = vector.broadcast %5 : vector<16x1xf32> to vector<16x128xf32>
    %7 = arith.addf %4, %6 : vector<16x128xf32>
    %8 = vector.extract_strided_slice %7 {offsets = [0, 0], sizes = [8, 128], strides = [1, 1]} : vector<16x128xf32> to vector<8x128xf32>
    %9 = vector.extract_strided_slice %7 {offsets = [8, 0], sizes = [8, 128], strides = [1, 1]} : vector<16x128xf32> to vector<8x128xf32>
    %10 = arith.negf %9 : vector<8x128xf32>
    %11 = math.exp %10 : vector<8x128xf32>
    %cst_8 = arith.constant 1.000000e+00 : f32
    %12 = vector.broadcast %cst_8 : f32 to vector<8x128xf32>
    %13 = arith.addf %12, %11 : vector<8x128xf32>
    %14 = arith.divf %12, %13 : vector<8x128xf32>
    %15 = arith.mulf %8, %14 : vector<8x128xf32>
    %cst_9 = arith.constant dense<0.000000e+00> : vector<24x128xf32>
    %16 = tpu.matmul %3, %15, %cst_9 {dimension_numbers = #tpu.dot_dimension_numbers<[1], [0], [0], [1], [0, 0, 1, 1], [], []>} : vector<24x8xf32>, vector<8x128xf32>, vector<24x128xf32> -> vector<24x128xf32>
    %c0_10 = arith.constant 0 : index
    %c0_11 = arith.constant 0 : index
    %17 = vector.load %arg6[%c0_10, %c0_11] : memref<24x1xf32, #tpu.memory_space<vmem>>, vector<24x1xf32>
    %18 = vector.broadcast %17 : vector<24x1xf32> to vector<24x128xf32>
    %19 = arith.addf %16, %18 : vector<24x128xf32>
    %20 = vector.extract_strided_slice %1 {offsets = [8, 0], sizes = [8, 128], strides = [1, 1]} : vector<16x128xf32> to vector<8x128xf32>
    %21 = vector.extract_strided_slice %19 {offsets = [8, 0], sizes = [16, 128], strides = [1, 1]} : vector<24x128xf32> to vector<16x128xf32>
    %c0_12 = arith.constant 0 : index
    %c0_13 = arith.constant 0 : index
    %c0_14 = arith.constant 0 : index
    %22 = vector.load %arg7[%c0_12, %c0_13, %c0_14] : memref<1x16x128xf32, #tpu.memory_space<vmem>>, vector<1x16x128xf32>
    %23 = vector.shape_cast %22 : vector<1x16x128xf32> to vector<16x128xf32>
    %24 = vector.shape_cast %21 : vector<16x128xf32> to vector<1x16x128xf32>
    tpu.vector_store %arg7[%c0_12, %c0_13, %c0_14], %24 {strides = array<i32>} : memref<1x16x128xf32, #tpu.memory_space<vmem>>, vector<1x16x128xf32>,
    %25 = vector.extract_strided_slice %19 {offsets = [0, 0], sizes = [8, 128], strides = [1, 1]} : vector<24x128xf32> to vector<8x128xf32>
    %26 = arith.addf %25, %20 : vector<8x128xf32>
    %c0_15 = arith.constant 0 : index
    %c0_16 = arith.constant 0 : index
    %c0_17 = arith.constant 0 : index
    %27 = vector.load %arg8[%c0_15, %c0_16, %c0_17] : memref<1x8x128xf32, #tpu.memory_space<vmem>>, vector<1x8x128xf32>
    %28 = vector.shape_cast %27 : vector<1x8x128xf32> to vector<8x128xf32>
    %29 = vector.shape_cast %26 : vector<8x128xf32> to vector<1x8x128xf32>
    tpu.vector_store %arg8[%c0_15, %c0_16, %c0_17], %29 {strides = array<i32>} : memref<1x8x128xf32, #tpu.memory_space<vmem>>, vector<1x8x128xf32>,
    return
  }
  func.func @transform_0(%arg0: i32, %arg1: i32) -> (i32, i32, i32) {
    %c0_i32 = arith.constant 0 : i32
    %c0_i32_0 = arith.constant 0 : i32
    return %arg0, %c0_i32, %arg1 : i32, i32, i32
  }
  func.func @transform_1(%arg0: i32, %arg1: i32) -> (i32, i32) {
    %c0_i32 = arith.constant 0 : i32
    %c0_i32_0 = arith.constant 0 : i32
    %c0_i32_1 = arith.constant 0 : i32
    return %c0_i32, %c0_i32_0 : i32, i32
  }
  func.func @transform_2(%arg0: i32, %arg1: i32) -> (i32, i32) {
    %c0_i32 = arith.constant 0 : i32
    %c0_i32_0 = arith.constant 0 : i32
    %c0_i32_1 = arith.constant 0 : i32
    return %c0_i32, %c0_i32_0 : i32, i32
  }
  func.func @transform_3(%arg0: i32, %arg1: i32) -> (i32, i32) {
    %c0_i32 = arith.constant 0 : i32
    %c0_i32_0 = arith.constant 0 : i32
    %c0_i32_1 = arith.constant 0 : i32
    return %c0_i32, %c0_i32_0 : i32, i32
  }
  func.func @transform_4(%arg0: i32, %arg1: i32) -> (i32, i32) {
    %c0_i32 = arith.constant 0 : i32
    %c0_i32_0 = arith.constant 0 : i32
    %c0_i32_1 = arith.constant 0 : i32
    return %c0_i32, %c0_i32_0 : i32, i32
  }
  func.func @transform_5(%arg0: i32, %arg1: i32) -> (i32, i32, i32) {
    %c0_i32 = arith.constant 0 : i32
    %c0_i32_0 = arith.constant 0 : i32
    return %arg0, %c0_i32, %arg1 : i32, i32, i32
  }
  func.func @transform_6(%arg0: i32, %arg1: i32) -> (i32, i32, i32) {
    %c0_i32 = arith.constant 0 : i32
    %c0_i32_0 = arith.constant 0 : i32
    return %arg0, %c0_i32, %arg1 : i32, i32, i32
  }
}

</mosaic_0001>

<llo_original>
// kernel: tpu_custom_call.1
$region0: #{tpu_custom_call.1}
  #allocation0 [shape = 'u32[]', space=smem, size = 0x4, offset = 0x4, fixed_abs, tag = 'smem constant byte address 0x4 - core index']
  #allocation1 [shape = 'u32[72,128]{1,0:T(1,128)}', space=vmem, size = 0x9000, scoped, tag = 'internal scratch']
  %s0 = inlined_call_operand.vmem [shape: f32[2,16,128], index: 0, kind: input, shape index: {}]
  %s1 = inlined_call_operand.vmem [shape: f32[16,16], index: 1, kind: input, shape index: {}]
  %s2 = inlined_call_operand.vmem [shape: f32[16,1], index: 2, kind: input, shape index: {}]
  %s3 = inlined_call_operand.vmem [shape: f32[24,8], index: 3, kind: input, shape index: {}]
  %s4 = inlined_call_operand.vmem [shape: f32[24,1], index: 4, kind: input, shape index: {}]
  %s5 = inlined_call_operand.hbm [shape: f32[2,16,128], index: 5, kind: output, shape index: {0}]
  %s6 = inlined_call_operand.hbm [shape: f32[2,8,128], index: 6, kind: output, shape index: {1}]
  %7 = xla_tuple %s5, %s6
  %s8 = sld [smem:[#allocation0]]
  $region61: #{tpu_custom_call.1} parent=0
    _
  %s10 = ssub.s32 1, %s8
  %s11 = scalar_select 0, %s10, %s8
  $region1: #{tpu_custom_call.1} parent=0
    #allocation2 [shape = 'u8[16384]{0}', space=vmem, size = 0x4000, scoped, tag = 'output window, operand 0']
    #allocation3 [shape = 's32[2]{0}', space=sflag, size = 0x8, scoped, tag = 'scoped memory for tpu_custom_call.1']
    #allocation4 [shape = 'u8[8192]{0}', space=vmem, size = 0x2000, scoped, tag = 'output window, operand 1']
    #allocation5 [shape = 's32[2]{0}', space=sflag, size = 0x8, scoped, tag = 'scoped memory for tpu_custom_call.1']
    %12 = vsyncpa [#allocation3], 0
    %s13 = scalar_lea.sflag [#allocation3], 1
    %14 = vsyncpa %s13, 0
    %15 = vsyncpa [#allocation5], 0
    %s16 = scalar_lea.sflag [#allocation5], 1
    %17 = vsyncpa %s16, 0
    loop: start=0, step=1, limit=4
    $region2: #{tpu_custom_call.1} parent=1 // loop_pre_header
      _
    $region3: #{tpu_custom_call.1} parent=1 // loop_header
      %s19 = sphi 0, %s23
      %p20 = scmp.ge.s32.totalorder %s19, 4
      %s26 = sphi 0, %s38
      %s27 = sphi 0, %s34
      %s28 = sphi 0, %s26
      %s29 = sphi 0, %s27
      %s30 = sphi 0, %s28
      %s31 = sphi 0, %s29
      %s43 = sphi 0, %s45
      %s46 = sphi 0, %s43
      %s47 = sphi 0, %s46
      %s63 = sphi 0, %s47
      %s67 = sphi 0, %s67
      %s69 = sphi 0, %s67
      %s70 = sphi 0, %s69
      %s84 = sphi 0, %s70
      %s88 = sphi 0, %s88
      %s90 = sphi 0, %s88
      %s91 = sphi 0, %s90
      %s105 = sphi 0, %s91
      %s109 = sphi 0, %s109
      %s111 = sphi 0, %s109
      %s112 = sphi 0, %s111
      %s126 = sphi 0, %s112
      %s130 = sphi 0, %s130
      %s132 = sphi 0, %s130
      %s133 = sphi 0, %s132
      %s147 = sphi 0, %s133
      %s155 = sphi 0, %s157
      %s158 = sphi 0, %s155
      %s159 = sphi 0, %s158
      %s175 = sphi 0, %s159
      %s183 = sphi 0, %s185
      %s186 = sphi 0, %s183
      %s187 = sphi 0, %s186
      %s203 = sphi 0, %s187
    $region4: #{tpu_custom_call.1} parent=1 // loop_header_branch
      %22 = sbr.rel (%p20) target = $region8
    $region5: #{tpu_custom_call.1} parent=1 // loop_body
      %s24 = ssub.s32 %s19, 1
      %s25 = ssub.s32 %s19, 2
      %s32 = sadd.s32 1, %s27
      %p33 = scmp.ge.s32.totalorder %s32, 1
      %s34 = scalar_select %p33, 0, %s32
      %s35 = sadd.s32 1, %s26
      %s36 = scalar_select %p33, %s35, %s26
      %p37 = scmp.ge.s32.totalorder %s36, 2
      %s38 = scalar_select %p37, 0, %s36
      %s39 = ssub.s32 %s26, %s38
      %s40 = ssub.s32 %s27, %s34
      %s41 = sor.u32 %s39, %s40
      %p42 = scmp.eq.s32.totalorder %s41, 0
      %s44 = sadd.s32 %s43, 1
      %s45 = scalar_select %p42, %s43, %s44
      %p48 = pneg %p42
      %p49 = scmp.eq.s32.totalorder %s19, 1
      %p50 = por %p48, %p49
      %p51 = scmp.ne.s32.totalorder %s43, %s46
      %p52 = scmp.eq.s32.totalorder %s19, 0
      %p53 = por %p51, %p52
      %p54 = scmp.ne.s32.totalorder %s43, %s46
      %p55 = scmp.eq.s32.totalorder %s24, 1
      %p56 = por %p54, %p55
      %p57 = scmp.ne.s32.totalorder %s46, %s47
      %p58 = scmp.eq.s32.totalorder %s24, 0
      %p59 = por %p57, %p58
      %p60 = scmp.ne.s32.totalorder %s46, %s47
      %p61 = scmp.eq.s32.totalorder %s25, 1
      %p62 = por %p60, %p61
      %p64 = scmp.ne.s32.totalorder %s47, %s63
      %p65 = scmp.eq.s32.totalorder %s25, 0
      %p66 = por %p64, %p65
      %s68 = sadd.s32 %s67, 1
      %p71 = scmp.eq.s32.totalorder %s19, 1
      %p72 = scmp.ne.s32.totalorder %s67, %s69
      %p73 = scmp.eq.s32.totalorder %s19, 0
      %p74 = por %p72, %p73
      %p75 = scmp.ne.s32.totalorder %s67, %s69
      %p76 = scmp.eq.s32.totalorder %s24, 1
      %p77 = por %p75, %p76
      %p78 = scmp.ne.s32.totalorder %s69, %s70
      %p79 = scmp.eq.s32.totalorder %s24, 0
      %p80 = por %p78, %p79
      %p81 = scmp.ne.s32.totalorder %s69, %s70
      %p82 = scmp.eq.s32.totalorder %s25, 1
      %p83 = por %p81, %p82
      %p85 = scmp.ne.s32.totalorder %s70, %s84
      %p86 = scmp.eq.s32.totalorder %s25, 0
      %p87 = por %p85, %p86
      %s89 = sadd.s32 %s88, 1
      %p92 = scmp.eq.s32.totalorder %s19, 1
      %p93 = scmp.ne.s32.totalorder %s88, %s90
      %p94 = scmp.eq.s32.totalorder %s19, 0
      %p95 = por %p93, %p94
      %p96 = scmp.ne.s32.totalorder %s88, %s90
      %p97 = scmp.eq.s32.totalorder %s24, 1
      %p98 = por %p96, %p97
      %p99 = scmp.ne.s32.totalorder %s90, %s91
      %p100 = scmp.eq.s32.totalorder %s24, 0
      %p101 = por %p99, %p100
      %p102 = scmp.ne.s32.totalorder %s90, %s91
      %p103 = scmp.eq.s32.totalorder %s25, 1
      %p104 = por %p102, %p103
      %p106 = scmp.ne.s32.totalorder %s91, %s105
      %p107 = scmp.eq.s32.totalorder %s25, 0
      %p108 = por %p106, %p107
      %s110 = sadd.s32 %s109, 1
      %p113 = scmp.eq.s32.totalorder %s19, 1
      %p114 = scmp.ne.s32.totalorder %s109, %s111
      %p115 = scmp.eq.s32.totalorder %s19, 0
      %p116 = por %p114, %p115
      %p117 = scmp.ne.s32.totalorder %s109, %s111
      %p118 = scmp.eq.s32.totalorder %s24, 1
      %p119 = por %p117, %p118
      %p120 = scmp.ne.s32.totalorder %s111, %s112
      %p121 = scmp.eq.s32.totalorder %s24, 0
      %p122 = por %p120, %p121
      %p123 = scmp.ne.s32.totalorder %s111, %s112
      %p124 = scmp.eq.s32.totalorder %s25, 1
      %p125 = por %p123, %p124
      %p127 = scmp.ne.s32.totalorder %s112, %s126
      %p128 = scmp.eq.s32.totalorder %s25, 0
      %p129 = por %p127, %p128
      %s131 = sadd.s32 %s130, 1
      %p134 = scmp.eq.s32.totalorder %s19, 1
      %p135 = scmp.ne.s32.totalorder %s130, %s132
      %p136 = scmp.eq.s32.totalorder %s19, 0
      %p137 = por %p135, %p136
      %p138 = scmp.ne.s32.totalorder %s130, %s132
      %p139 = scmp.eq.s32.totalorder %s24, 1
      %p140 = por %p138, %p139
      %p141 = scmp.ne.s32.totalorder %s132, %s133
      %p142 = scmp.eq.s32.totalorder %s24, 0
      %p143 = por %p141, %p142
      %p144 = scmp.ne.s32.totalorder %s132, %s133
      %p145 = scmp.eq.s32.totalorder %s25, 1
      %p146 = por %p144, %p145
      %p148 = scmp.ne.s32.totalorder %s133, %s147
      %p149 = scmp.eq.s32.totalorder %s25, 0
      %p150 = por %p148, %p149
      %s151 = ssub.s32 %s26, %s38
      %s152 = ssub.s32 %s27, %s34
      %s153 = sor.u32 %s151, %s152
      %p154 = scmp.eq.s32.totalorder %s153, 0
      %s156 = sadd.s32 %s155, 1
      %s157 = scalar_select %p154, %s155, %s156
      %p160 = pneg %p154
      %p161 = scmp.eq.s32.totalorder %s19, 1
      %p162 = por %p160, %p161
      %p163 = scmp.ne.s32.totalorder %s155, %s158
      %p164 = scmp.eq.s32.totalorder %s19, 0
      %p165 = por %p163, %p164
      %p166 = scmp.ne.s32.totalorder %s155, %s158
      %p167 = scmp.eq.s32.totalorder %s24, 1
      %p168 = por %p166, %p167
      %p169 = scmp.ne.s32.totalorder %s158, %s159
      %p170 = scmp.eq.s32.totalorder %s24, 0
      %p171 = por %p169, %p170
      %p172 = scmp.ne.s32.totalorder %s158, %s159
      %p173 = scmp.eq.s32.totalorder %s25, 1
      %p174 = por %p172, %p173
      %p176 = scmp.ne.s32.totalorder %s159, %s175
      %p177 = scmp.eq.s32.totalorder %s25, 0
      %p178 = por %p176, %p177
      %s179 = ssub.s32 %s26, %s38
      %s180 = ssub.s32 %s27, %s34
      %s181 = sor.u32 %s179, %s180
      %p182 = scmp.eq.s32.totalorder %s181, 0
      %s184 = sadd.s32 %s183, 1
      %s185 = scalar_select %p182, %s183, %s184
      %p188 = pneg %p182
      %p189 = scmp.eq.s32.totalorder %s19, 1
      %p190 = por %p188, %p189
      %p191 = scmp.ne.s32.totalorder %s183, %s186
      %p192 = scmp.eq.s32.totalorder %s19, 0
      %p193 = por %p191, %p192
      %p194 = scmp.ne.s32.totalorder %s183, %s186
      %p195 = scmp.eq.s32.totalorder %s24, 1
      %p196 = por %p194, %p195
      %p197 = scmp.ne.s32.totalorder %s186, %s187
      %p198 = scmp.eq.s32.totalorder %s24, 0
      %p199 = por %p197, %p198
      %p200 = scmp.ne.s32.totalorder %s186, %s187
      %p201 = scmp.eq.s32.totalorder %s25, 1
      %p202 = por %p200, %p201
      %p204 = scmp.ne.s32.totalorder %s187, %s203
      %p205 = scmp.eq.s32.totalorder %s25, 0
      %p206 = por %p204, %p205
      %p207 = scmp.le.s32.totalorder 1, %s19
      %p208 = scmp.lt.s32.totalorder %s19, 3
      %p209 = pnand %p207, %p208
      %p210 = pneg %p209
      // Predicated region
      $region9: #{tpu_custom_call.1} parent=5 // pred_check
        _
      $region10: #{tpu_custom_call.1} parent=5 // pred_check_branch
        %212 = sbr.rel (%p209) target = $region12
      $region11: #{tpu_custom_call.1} parent=5 // pred_region
        %s213 = ssub.s32 %s19, 1
        // Predicated region
        $region13: #{tpu_custom_call.1} parent=11 // pred_check
          %p214 = pneg %p80
        $region14: #{tpu_custom_call.1} parent=11 // pred_check_branch
          %216 = sbr.rel (%p214) target = $region16
        $region15: #{tpu_custom_call.1} parent=11 // pred_region
          _
        $region16: #{tpu_custom_call.1} parent=11 // pred_fallthru
          _
        // Predicated region
        $region17: #{tpu_custom_call.1} parent=11 // pred_check
          %p217 = pneg %p101
        $region18: #{tpu_custom_call.1} parent=11 // pred_check_branch
          %219 = sbr.rel (%p217) target = $region20
        $region19: #{tpu_custom_call.1} parent=11 // pred_region
          _
        $region20: #{tpu_custom_call.1} parent=11 // pred_fallthru
          _
        // Predicated region
        $region21: #{tpu_custom_call.1} parent=11 // pred_check
          %p220 = pneg %p122
        $region22: #{tpu_custom_call.1} parent=11 // pred_check_branch
          %222 = sbr.rel (%p220) target = $region24
        $region23: #{tpu_custom_call.1} parent=11 // pred_region
          _
        $region24: #{tpu_custom_call.1} parent=11 // pred_fallthru
          _
        // Predicated region
        $region25: #{tpu_custom_call.1} parent=11 // pred_check
          %p223 = pneg %p143
        $region26: #{tpu_custom_call.1} parent=11 // pred_check_branch
          %225 = sbr.rel (%p223) target = $region28
        $region27: #{tpu_custom_call.1} parent=11 // pred_region
          _
        $region28: #{tpu_custom_call.1} parent=11 // pred_fallthru
          _
      $region12: #{tpu_custom_call.1} parent=5 // pred_fallthru
        _
      %p226 = scmp.lt.s32.totalorder %s19, 2
      // Predicated region
      $region29: #{tpu_custom_call.1} parent=5 // pred_check
        %p227 = pneg %p226
      $region30: #{tpu_custom_call.1} parent=5 // pred_check_branch
        %229 = sbr.rel (%p227) target = $region32
      $region31: #{tpu_custom_call.1} parent=5 // pred_region
        // Predicated region
        $region33: #{tpu_custom_call.1} parent=31 // pred_check
          %p230 = pneg %p53
        $region34: #{tpu_custom_call.1} parent=31 // pred_check_branch
          %232 = sbr.rel (%p230) target = $region36
        $region35: #{tpu_custom_call.1} parent=31 // pred_region
          %p233 = scmp.lt.s32.totalorder %s26, 1
          %s234 = scalar_select %p233, %s26, 1
          %p235 = scmp.lt.s32.totalorder %s27, 0
          %s236 = scalar_select %p235, %s27, 0
          %s237 = smul.addr %s234, 2
          %s238 = sadd.s32 %s236, %s237
          %s239 = smul.addr %s238, 8
          %s240 = scalar_lea.vmem %s0, %s239
        $region36: #{tpu_custom_call.1} parent=31 // pred_fallthru
          _
      $region32: #{tpu_custom_call.1} parent=5 // pred_fallthru
        _
      %p241 = scmp.le.s32.totalorder 1, %s19
      %p242 = scmp.lt.s32.totalorder %s19, 3
      %p243 = pnand %p241, %p242
      %p244 = pneg %p243
      // Predicated region
      $region37: #{tpu_custom_call.1} parent=5 // pred_check
        _
      $region38: #{tpu_custom_call.1} parent=5 // pred_check_branch
        %246 = sbr.rel (%p243) target = $region40
      $region39: #{tpu_custom_call.1} parent=5 // pred_region
        %s247 = ssub.s32 %s19, 1
        %p248 = scmp.lt.s32.totalorder %s28, 1
        %s249 = scalar_select %p248, %s28, 1
        %p250 = scmp.lt.s32.totalorder %s29, 0
        %s251 = scalar_select %p250, %s29, 0
        %s252 = smul.addr %s249, 2
        %s253 = sadd.s32 %s251, %s252
        %s254 = smul.addr %s253, 8
        %s255 = scalar_lea.vmem %s0, %s254
        %p256 = pneg %p59
        %p257 = pneg %p56
        %p258 = pneg %p80
        %p259 = pneg %p77
        %p260 = pneg %p101
        %p261 = pneg %p98
        %p262 = pneg %p122
        %p263 = pneg %p119
        %p264 = pneg %p143
        %p265 = pneg %p140
        %p266 = pneg %p171
        %p267 = pneg %p168
        %s268 = sand.u32 %s158, 1
        %s269 = scalar_lea.sflag [#allocation3], %s268
        %s270 = sand.u32 %s158, 1
        %s271 = smul.addr %s270, 16
        %s272 = scalar_lea.vmem [#allocation2], %s271
        %p273 = pneg %p199
        %p274 = pneg %p196
        %s275 = sand.u32 %s186, 1
        %s276 = scalar_lea.sflag [#allocation5], %s275
        %s277 = sand.u32 %s186, 1
        %s278 = smul.addr %s277, 8
        %s279 = scalar_lea.vmem [#allocation4], %s278
        %p280 = scmp.lt.s32.totalorder %s28, 1
        %s281 = scalar_select %p280, %s28, 1
        %p282 = scmp.lt.s32.totalorder %s29, 0
        %s283 = scalar_select %p282, %s29, 0
        %s284 = smul.addr %s281, 2
        %s285 = sadd.s32 %s283, %s284
        %s286 = smul.addr %s285, 8
        %s287 = scalar_lea.vmem %s0, %s286
        %v288 = vld [vmem:[%s287] sm:$0xff]
        %v289 = vld [vmem:[%s287 + $0x8] sm:$0xff]
        %v290 = vld [vmem:[%s1] sm:$0xff]
        %v291 = vld [vmem:[%s1 + $0x8] sm:$0xff]
        %v292 = vld [vmem:[%s3] sm:$0xff]
        %v293 = vld [vmem:[%s3 + $0x8] sm:$0xff]
        %v294 = vld [vmem:[%s3 + $0x10] sm:$0xff]
        %v295 = vld [vmem:[%s2] sm:$0xff]
        %v296 = vld [vmem:[%s2 + $0x8] sm:$0xff]
        %298 = vset.pattern.permute.xlu0 0
        %299 = vperm.xlu0 %298, %v295
        %v300 = vpop.permute.xlu0 %299
        %303 = vset.pattern.permute.xlu0 0
        %304 = vperm.xlu0 %303, %v296
        %v305 = vpop.permute.xlu0 %304
        %vm307 = vcmask 130048
        %v309 = vsel %vm307, %v290, 0
        %v312 = vsel %vm307, %v291, 0
        %314 = vmatpush.msra.mxu0 0.0
        %315 = vmatpush.msra.mxu0 0.0
        %316 = vmatpush.msra.mxu0 0.0
        %317 = vmatpush.msra.mxu0 0.0
        %318 = vmatpush.msra.mxu0 0.0
        %319 = vmatpush.msra.mxu0 0.0
        %320 = vmatpush.msra.mxu0 0.0
        %321 = vmatpush.msra.mxu0 0.0
        %322 = vmatpush.msra.mxu0 0.0
        %323 = vmatpush.msra.mxu0 0.0
        %324 = vmatpush.msra.mxu0 0.0
        %325 = vmatpush.msra.mxu0 0.0
        %326 = vmatpush.msra.mxu0 0.0
        %327 = vmatpush.msra.mxu0 0.0
        %328 = vmatpush.msra.mxu0 %v289
        %329 = vmatpush.msra.mxu0 %v288
        %330 = vmatmul.f32.gmra.mxu0 %v309
        %v331 = vpop.f32.mrf.mxu0
        %v332 = vadd.f32 %v300, %v331
        %333 = vmatmul.f32.gmra.mxu0 %v312
        %v334 = vpop.f32.mrf.mxu0
        %v335 = vadd.f32 %v305, %v334
        %336 = vdwg.mxu0
        %v337 = vxor.u32 %v335, 2147483648
        %v338 = vmul.f32 %v337, 1.442695
        %v339 = vpow.pop %v338
        %v340 = vadd.f32 %v339, 1.0
        %v341 = vrcp.pop %v340
        %v342 = vmul.f32 %v340, %v341
        %v343 = vsub.f32 1.0, %v342
        %v344 = vmul.f32 %v341, %v343
        %v345 = vadd.f32 %v341, %v344
        %vm346 = vweird.f32 %v340
        %vm347 = vweird.f32 %v341
        %vm348 = vmor %vm346, %vm347
        %v349 = vsel %vm348, %v341, %v345
        %v350 = vand.u32 2147483647, %v340
        %vm351 = vcmp.eq.f32.partialorder %v350, 8.507059e+37
        %v352 = vand.u32 %v340, 2147483648
        %v353 = vor.u32 1.1754944e-38, %v352
        %v354 = vsel %vm351, %v353, %v349
        %v355 = vmul.f32 1.0, %v354
        %v356 = vmul.f32 %v332, %v355
        %v357 = vld [vmem:[%s4] sm:$0xff]
        %v358 = vld [vmem:[%s4 + $0x8] sm:$0xff]
        %v359 = vld [vmem:[%s4 + $0x10] sm:$0xff]
        %361 = vset.pattern.permute.xlu0 0
        %362 = vperm.xlu0 %361, %v357
        %v363 = vpop.permute.xlu0 %362
        %366 = vset.pattern.permute.xlu0 0
        %367 = vperm.xlu0 %366, %v358
        %v368 = vpop.permute.xlu0 %367
        %371 = vset.pattern.permute.xlu0 0
        %372 = vperm.xlu0 %371, %v359
        %v373 = vpop.permute.xlu0 %372
        %vm375 = vcmask 64512
        %v377 = vsel %vm375, %v292, 0
        %v380 = vsel %vm375, %v293, 0
        %v383 = vsel %vm375, %v294, 0
        %385 = vmatpush.msra.mxu0 0.0
        %386 = vmatpush.msra.mxu0 0.0
        %387 = vmatpush.msra.mxu0 0.0
        %388 = vmatpush.msra.mxu0 0.0
        %389 = vmatpush.msra.mxu0 0.0
        %390 = vmatpush.msra.mxu0 0.0
        %391 = vmatpush.msra.mxu0 0.0
        %392 = vmatpush.msra.mxu0 0.0
        %393 = vmatpush.msra.mxu0 0.0
        %394 = vmatpush.msra.mxu0 0.0
        %395 = vmatpush.msra.mxu0 0.0
        %396 = vmatpush.msra.mxu0 0.0
        %397 = vmatpush.msra.mxu0 0.0
        %398 = vmatpush.msra.mxu0 0.0
        %399 = vmatpush.msra.mxu0 0.0
        %400 = vmatpush.msra.mxu0 %v356
        %401 = vmatmul.f32.gmra.mxu0 %v377
        %v402 = vpop.f32.mrf.mxu0
        %v403 = vadd.f32 %v363, %v402
        %404 = vmatmul.f32.gmra.mxu0 %v380
        %v405 = vpop.f32.mrf.mxu0
        %v406 = vadd.f32 %v368, %v405
        %407 = vmatmul.f32.gmra.mxu0 %v383
        %v408 = vpop.f32.mrf.mxu0
        %v409 = vadd.f32 %v373, %v408
        %410 = vdwg.mxu0
        %411 = vst [vmem:[%s272] sm:$0xff] %v406
        %412 = vst [vmem:[%s272 + $0x8] sm:$0xff] %v409
        %v413 = vadd.f32 %v403, %v289
        %414 = vst [vmem:[%s279] sm:$0xff] %v413
        %s415 = sand.u32 %s158, 1
        %s416 = scalar_lea.sflag [#allocation3], %s415
        %s417 = sand.u32 %s158, 1
        %s418 = smul.addr %s417, 16
        %s419 = scalar_lea.vmem [#allocation2], %s418
        %s420 = sand.u32 %s186, 1
        %s421 = scalar_lea.sflag [#allocation5], %s420
        %s422 = sand.u32 %s186, 1
        %s423 = smul.addr %s422, 8
        %s424 = scalar_lea.vmem [#allocation4], %s423
        // Predicated region
        $region41: #{tpu_custom_call.1} parent=39 // pred_check
          %p425 = pneg %p168
        $region42: #{tpu_custom_call.1} parent=39 // pred_check_branch
          %427 = sbr.rel (%p425) target = $region44
        $region43: #{tpu_custom_call.1} parent=39 // pred_region
          %429 = vsyncadd %s416, 0
          %s430 = smul.addr %s28, 2
          %s431 = sadd.s32 %s29, %s430
          %s432 = smul.addr %s431, 8
          %s433 = scalar_lea.hbm %s5, %s432
          %s434 = sshll.u32 %s419, 4
          %s435 = int_to_ptr.vmem [resolvable:$true] %s434
          %s436 = sshll.u32 %s433, 4
          %s437 = int_to_ptr.hbm [resolvable:$true] %s436
          %442 = dma.vmem_to_hbm [thread:$0]  %s435, 256, %s437, %s416, 128, 128, 8
        $region44: #{tpu_custom_call.1} parent=39 // pred_fallthru
          _
        // Predicated region
        $region45: #{tpu_custom_call.1} parent=39 // pred_check
          %p443 = pneg %p196
        $region46: #{tpu_custom_call.1} parent=39 // pred_check_branch
          %445 = sbr.rel (%p443) target = $region48
        $region47: #{tpu_custom_call.1} parent=39 // pred_region
          %447 = vsyncadd %s421, 0
          %s448 = sadd.s32 %s29, %s28
          %s449 = smul.addr %s448, 8
          %s450 = scalar_lea.hbm %s6, %s449
          %s452 = sshll.u32 %s424, 4
          %s453 = int_to_ptr.vmem [resolvable:$true] %s452
          %s454 = sshll.u32 %s450, 4
          %s455 = int_to_ptr.hbm [resolvable:$true] %s454
          %457 = dma.vmem_to_hbm [thread:$0]  %s453, 128, %s455, %s421
        $region48: #{tpu_custom_call.1} parent=39 // pred_fallthru
          _
      $region40: #{tpu_custom_call.1} parent=5 // pred_fallthru
        _
      %p458 = scmp.le.s32.totalorder 2, %s19
      // Predicated region
      $region49: #{tpu_custom_call.1} parent=5 // pred_check
        %p459 = pneg %p458
      $region50: #{tpu_custom_call.1} parent=5 // pred_check_branch
        %461 = sbr.rel (%p459) target = $region52
      $region51: #{tpu_custom_call.1} parent=5 // pred_region
        %s462 = ssub.s32 %s19, 2
        // Predicated region
        $region53: #{tpu_custom_call.1} parent=51 // pred_check
          %p463 = pneg %p174
        $region54: #{tpu_custom_call.1} parent=51 // pred_check_branch
          %465 = sbr.rel (%p463) target = $region56
        $region55: #{tpu_custom_call.1} parent=51 // pred_region
          %s466 = sand.u32 %s159, 1
          %s467 = scalar_lea.sflag [#allocation3], %s466
          %s468 = sand.u32 %s159, 1
          %s469 = smul.addr %s468, 16
          %s470 = scalar_lea.vmem [#allocation2], %s469
          %472 = dma.done %s467, 256
        $region56: #{tpu_custom_call.1} parent=51 // pred_fallthru
          _
        // Predicated region
        $region57: #{tpu_custom_call.1} parent=51 // pred_check
          %p473 = pneg %p202
        $region58: #{tpu_custom_call.1} parent=51 // pred_check_branch
          %475 = sbr.rel (%p473) target = $region60
        $region59: #{tpu_custom_call.1} parent=51 // pred_region
          %s476 = sand.u32 %s187, 1
          %s477 = scalar_lea.sflag [#allocation5], %s476
          %s478 = sand.u32 %s187, 1
          %s479 = smul.addr %s478, 8
          %s480 = scalar_lea.vmem [#allocation4], %s479
          %482 = dma.done %s477, 128
        $region60: #{tpu_custom_call.1} parent=51 // pred_fallthru
          _
      $region52: #{tpu_custom_call.1} parent=5 // pred_fallthru
        _
    $region6: #{tpu_custom_call.1} parent=1 // loop_footer
      %s23 = sadd.s32 1, %s19
    $region7: #{tpu_custom_call.1} parent=1 // loop_footer_branch
      %18 = sbr.rel target = $region3
    $region8: #{tpu_custom_call.1} parent=1 // loop_exit
      _
    %483 = vsyncpa [#allocation3], 1
    %s484 = scalar_lea.sflag [#allocation3], 1
    %485 = vsyncpa %s484, 1
    %486 = vsyncpa [#allocation5], 1
    %s487 = scalar_lea.sflag [#allocation5], 1
    %488 = vsyncpa %s487, 1

</llo_original>
